<compile_context>
chip_gen: v5e
topology: v5e:2x2
jax: 0.10.0
libtpu: 0.0.40
codegen_flags: <defaults>
</compile_context>

<pallas_src>
import jax
import jax.numpy as jnp
from jax.experimental import pallas as pl
from jax.experimental.pallas import tpu as pltpu


# ----------------------------------------------------------------------------- helpers
def _round_up(x, m):
    return ((x + m - 1) // m) * m


def _round_down(x, m):
    return (x // m) * m


def _const_spec(shape):
    """Weight/bias BlockSpec: constant index_map, single-buffered if supported."""
    index_map = lambda b: tuple(0 for _ in shape)
    buffered = getattr(pl, "Buffered", None)
    if buffered is not None:
        try:
            return pl.BlockSpec(shape, index_map, pipeline_mode=buffered(1))
        except (TypeError, ValueError):
            pass
    # Fallback: default double-buffered weights.  Correct, just more VMEM --
    # the tile-size budget below already charges weights x2 to stay safe.
    return pl.BlockSpec(shape, index_map)


def _derive_vmem_budget(requested):
    """Per-generation VMEM limit: ~75% of physical (96 MiB v5e/v6e, 48 MiB v7x)."""
    if requested is not None:
        return int(requested)
    phys = None
    try:
        info = pltpu.get_tpu_info()
        phys = getattr(info, "vmem_capacity_bytes", None)
    except Exception:
        phys = None
    if not phys:
        phys = 64 * 1024 * 1024          # conservative (v7x-sized) fallback
    return max(32 * 1024 * 1024, int(phys * 0.75))


def _derive_batch_tile(B, S, H, L, compute_dtype, vmem_budget, requested):
    """Biggest sublane-aligned batch tile that fits the VMEM budget."""
    itemsize = jnp.dtype(compute_dtype).itemsize
    sub = max(8, 32 // max(itemsize, 1))          # 8 for f32, 16 for bf16 packing

    if requested is not None:
        tb = max(sub, _round_up(int(requested), sub))
    else:
        H_pad = _round_up(H, 128)
        L_pad = _round_up(L, 128)
        S_sub = _round_up(S, sub)                 # seq on sublanes in (TB,S,H)
        S_lane = _round_up(S, 128)                # seq on lanes for mask/scores

        # Resident weights & biases, charged x2 in case Buffered(1) falls back
        # to the default double-buffered pipeline on this jax version.
        weight_bytes = 2 * itemsize * (8 * H_pad + H_pad * H_pad + H_pad * L_pad)
        weight_bytes += 2 * 4 * 8 * (H_pad + L_pad)          # f32 biases (1, .)
        avail = vmem_budget - weight_bytes - (2 << 20)        # compiler slack

        # Bytes a single batch row costs per grid step:
        per_ex = (
            2 * S_sub * H_pad * itemsize          # feature block, double-buffered
            + 2 * S_lane * itemsize               # mask block, double-buffered
            + 4 * 8 * S_lane * 4                  # logits/exp/prob f32 temps (TB,1,S)
            + 8 * S_lane * itemsize               # prob cast for pooling matmul
            + 8 * H_pad * itemsize                # ws broadcast row (TB,1,H)
            + 2 * H_pad * 4                       # context + hidden (f32)
            + 2 * L_pad * 4                       # output block, double-buffered
        )
        tb = avail // max(per_ex, 1)
        tb = max(sub, _round_down(int(tb), sub))

    # Never larger than the (padded) batch.
    tb = min(tb, _round_up(B, sub))
    # Keep >= 2 grid steps when the batch allows it, so the "parallel" batch
    # axis can feed both TensorCores on v7x (and megacore on v5e/v6e).
    if requested is None and B > sub:
        tb = min(tb, max(sub, _round_down((B + 1) // 2, sub)))
    return max(tb, sub)


# ----------------------------------------------------------------------------- kernel
def attention_pooling_kernel(f_ref, mask_ref, ws_ref, w1_ref, b1_ref,
                             w2_ref, b2_ref, out_ref):
    # f_ref:    (TB, S, H)  batch tile of features (bf16 or f32)
    # mask_ref: (TB, S)     lane-dense mask tile
    # ws_ref:   (1, H)      score weight row
    # w1_ref:   (H, H),  b1_ref: (1, H)  (bias f32)
    # w2_ref:   (H, L),  b2_ref: (1, L)  (bias f32)
    # out_ref:  (TB, L)
    f = f_ref[...]
    tb, s, h = f.shape

    # ---- score logits on the MXU: (TB,1,H) x (TB,S,H)^T_h -> (TB,1,S) f32.
    # S lands dense on the lane axis, so the softmax below is lane-dense.
    # The torch module adds a scalar bias before Softmax(dim=1); softmax is
    # shift-invariant in a scalar constant, so the bias is dropped here.
    ws_b = jnp.broadcast_to(ws_ref[...].reshape(1, 1, h), (tb, 1, h)).astype(f.dtype)
    logits = jnp.einsum('tqh,tsh->tqs', ws_b, f,
                        preferred_element_type=jnp.float32)          # (TB,1,S)

    # ---- softmax over the sequence axis (last axis), in f32
    m = jnp.max(logits, axis=-1, keepdims=True)
    e = jnp.exp(logits - m)
    denom = jnp.sum(e, axis=-1, keepdims=True)
    p = e * pl.reciprocal(denom, approx=True)                        # (TB,1,S)

    # ---- mask applied AFTER the softmax (exact torch semantics, no renorm)
    p = p * mask_ref[...][:, None, :].astype(jnp.float32)

    # ---- pooling on the MXU: context[t,h] = sum_s p[t,s] * f[t,s,h].
    # p is cast to the streaming dtype: keeping it f32 would make JAX's type
    # promotion materialise a full f32 copy of the feature tile in VMEM,
    # which costs far more than the bf16 rounding on the attention weights.
    ctx = jnp.einsum('tqs,tsh->tqh', p.astype(f.dtype), f,
                     preferred_element_type=jnp.float32)             # (TB,1,H)
    context = ctx.reshape(tb, h)                                     # (TB, H)

    # ---- dense head: Linear -> Tanh -> Linear (M=TB MXU matmuls, f32 acc)
    hid = jnp.tanh(
        jnp.dot(context.astype(w1_ref.dtype), w1_ref[...],
                preferred_element_type=jnp.float32) + b1_ref[...])
    out = jnp.dot(hid.astype(w2_ref.dtype), w2_ref[...],
                  preferred_element_type=jnp.float32) + b2_ref[...]
    out_ref[...] = out.astype(out_ref.dtype)


# ----------------------------------------------------------------------------- wrapper
def attention_pooling_head(features, input_mask, params, *,
                           batch_tile=None,
                           compute_dtype=jnp.bfloat16,
                           vmem_limit_bytes=None):
    """features: [B, S, H]; input_mask: [B, S] or None; returns [B, num_labels]."""
    B, S, H = features.shape
    L = params["w2"].shape[1]
    out_dtype = features.dtype

    vmem_budget = _derive_vmem_budget(vmem_limit_bytes)
    tb = _derive_batch_tile(B, S, H, L, compute_dtype, vmem_budget, batch_tile)
    b_pad = _round_up(B, tb)

    if input_mask is None:
        mask = jnp.ones((B, S), dtype=compute_dtype)
    else:
        mask = input_mask.reshape(B, S).astype(compute_dtype)

    f = features.astype(compute_dtype)
    if b_pad != B:
        # Padded rows carry zero features + zero mask -> finite garbage
        # outputs, sliced off below (no in-kernel batch reductions exist).
        f = jnp.pad(f, ((0, b_pad - B), (0, 0), (0, 0)))
        mask = jnp.pad(mask, ((0, b_pad - B), (0, 0)))

    # Score weight stored lane-dense as a (1, H) row (a (H, 1) column would
    # be padded 128x in VMEM).  The score bias is intentionally not passed
    # (softmax shift invariance).
    ws = params["ws"].reshape(1, H).astype(compute_dtype)
    w1 = params["w1"].astype(compute_dtype)
    w2 = params["w2"].astype(compute_dtype)
    b1 = params["b1"].astype(jnp.float32)
    b2 = params["b2"].astype(jnp.float32)

    out = pl.pallas_call(
        attention_pooling_kernel,
        out_shape=jax.ShapeDtypeStruct((b_pad, L), out_dtype),
        grid=(b_pad // tb,),
        in_specs=[
            pl.BlockSpec((tb, S, H), lambda b: (b, 0, 0)),   # features tile
            pl.BlockSpec((tb, S), lambda b: (b, 0)),         # lane-dense mask
            _const_spec((1, H)),                             # score weight row
            _const_spec((H, H)),                             # dense W1
            _const_spec((1, H)),                             # dense b1
            _const_spec((H, L)),                             # dense W2
            _const_spec((1, L)),                             # dense b2
        ],
        # (TB, L) output with L < 128 is a masked partial store per step;
        # output bytes are tiny so larger TB (not padding L) amortizes it.
        out_specs=pl.BlockSpec((tb, L), lambda b: (b, 0)),
        compiler_params=pltpu.CompilerParams(
            dimension_semantics=("parallel",),               # megacore / 2-TC split
            vmem_limit_bytes=vmem_budget,
        ),
    )(f, mask, ws, w1, b1, w2, b2)

    return out[:B]


# ----------------------------------------------------------------------------- reference / demo
def make_params(key, hidden_size, num_labels, dtype=jnp.float32):
    """Deterministic synthetic parameters (shapes follow the torch module)."""
    ks = jax.random.split(key, 6)
    scale = 0.05
    return {
        # nn.Linear(hidden_size, 1) stored as (in, out)
        "ws": (scale * jax.random.normal(ks[0], (hidden_size, 1))).astype(dtype),
        "bs": (scale * jax.random.normal(ks[1], (1, 1))).astype(dtype),
        # nn.Linear(hidden_size, hidden_size)
        "w1": (scale * jax.random.normal(ks[2], (hidden_size, hidden_size))).astype(dtype),
        "b1": (scale * jax.random.normal(ks[3], (1, hidden_size))).astype(dtype),
        # nn.Linear(hidden_size, num_labels)
        "w2": (scale * jax.random.normal(ks[4], (hidden_size, num_labels))).astype(dtype),
        "b2": (scale * jax.random.normal(ks[5], (1, num_labels))).astype(dtype),
    }


def reference(features, input_mask, params):
    """Pure-JAX f32 reference mirroring the PyTorch forward (bias included)."""
    logits = features @ params["ws"] + params["bs"]            # (B, S, 1)
    scores = jax.nn.softmax(logits, axis=1)                    # softmax over seq
    scores_t = jnp.swapaxes(scores, 1, 2)                      # (B, 1, S)
    if input_mask is not None:
        scores_t = scores_t * input_mask[:, None, :]
    context = jnp.squeeze(scores_t @ features, axis=1)         # (B, H)
    h = jnp.tanh(context @ params["w1"] + params["b1"])
    return h @ params["w2"] + params["b2"]


if __name__ == "__main__":
    # Small but TPU-shaped demo sizes; B=10 exercises the batch padding path
    # and (on the f32 path, tile=8) a 2-step grid.
    B, S, H, L = 10, 16, 128, 4

    key = jax.random.PRNGKey(0)
    k_feat, k_param = jax.random.split(key)

    features = jax.random.normal(k_feat, (B, S, H), dtype=jnp.float32)
    # deterministic mask: last three sequence positions of batch 1 masked out
    input_mask = jnp.ones((B, S), dtype=jnp.float32).at[1, -3:].set(0.0)

    params = make_params(k_param, H, L)
    ref = reference(features, input_mask, params)

    # 1) f32 streaming path (only deviation from the reference is the EUP
    #    approximate reciprocal in the softmax and the dropped scalar bias,
    #    which is a mathematical no-op).
    out_f32 = attention_pooling_head(features, input_mask, params,
                                     compute_dtype=jnp.float32)
    out_f32 = jax.block_until_ready(out_f32)
    assert out_f32.shape == (B, L)
    assert jnp.allclose(out_f32, ref, atol=5e-3, rtol=5e-3), \
        "Pallas kernel (f32) mismatch vs reference"

    # 2) fast path: bf16 streaming of features / weights (bandwidth win)
    out_bf16 = attention_pooling_head(features, input_mask, params,
                                      compute_dtype=jnp.bfloat16)
    out_bf16 = jax.block_until_ready(out_bf16)
    assert out_bf16.shape == (B, L)
    assert jnp.allclose(out_bf16, ref, atol=3e-2, rtol=3e-2), \
        "Pallas kernel (bf16) mismatch vs reference"

    # 3) no-mask path
    out_nomask = jax.block_until_ready(
        attention_pooling_head(features, None, params,
                               compute_dtype=jnp.bfloat16))
    assert jnp.allclose(out_nomask, reference(features, None, params),
                        atol=3e-2, rtol=3e-2), \
        "Pallas kernel (no mask) mismatch vs reference"

    print("KERNEL_OK")
</pallas_src>

<mosaic_0001>
module attributes {stable_mosaic.version = 11 : i64} {
  func.func @attention_pooling_kernel(%arg0: i32, %arg1: memref<8x16x128xf32, #tpu.memory_space<vmem>>, %arg2: memref<8x16xf32, #tpu.memory_space<vmem>>, %arg3: memref<1x128xf32, #tpu.memory_space<vmem>>, %arg4: memref<128x128xf32, #tpu.memory_space<vmem>>, %arg5: memref<1x128xf32, #tpu.memory_space<vmem>>, %arg6: memref<128x4xf32, #tpu.memory_space<vmem>>, %arg7: memref<1x4xf32, #tpu.memory_space<vmem>>, %arg8: memref<8x4xf32, #tpu.memory_space<vmem>>) attributes {dimension_semantics = [#tpu.dimension_semantics<parallel>], iteration_bounds = array<i64: 2>, scalar_prefetch = 0 : i64, scratch_operands = 0 : i64, tpu.core_type = #tpu.core_type<tc>, window_params = [{transform_indices = @transform_0, window_bounds = array<i64: 8, 16, 128>}, {transform_indices = @transform_1, window_bounds = array<i64: 8, 16>}, {pipeline_mode = #tpu.pipeline_mode<synchronous>, transform_indices = @transform_2, window_bounds = array<i64: 1, 128>}, {pipeline_mode = #tpu.pipeline_mode<synchronous>, transform_indices = @transform_3, window_bounds = array<i64: 128, 128>}, {pipeline_mode = #tpu.pipeline_mode<synchronous>, transform_indices = @transform_4, window_bounds = array<i64: 1, 128>}, {pipeline_mode = #tpu.pipeline_mode<synchronous>, transform_indices = @transform_5, window_bounds = array<i64: 128, 4>}, {pipeline_mode = #tpu.pipeline_mode<synchronous>, transform_indices = @transform_6, window_bounds = array<i64: 1, 4>}, {transform_indices = @transform_7, window_bounds = array<i64: 8, 4>}]} {
    %c0 = arith.constant 0 : index
    %c0_0 = arith.constant 0 : index
    %c0_1 = arith.constant 0 : index
    %0 = vector.load %arg1[%c0, %c0_0, %c0_1] : memref<8x16x128xf32, #tpu.memory_space<vmem>>, vector<8x16x128xf32>
    %c0_2 = arith.constant 0 : index
    %c0_3 = arith.constant 0 : index
    %1 = vector.load %arg3[%c0_2, %c0_3] : memref<1x128xf32, #tpu.memory_space<vmem>>, vector<1x128xf32>
    %2 = vector.shape_cast %1 : vector<1x128xf32> to vector<1x1x128xf32>
    %3 = vector.shape_cast %2 : vector<1x1x128xf32> to vector<1x1x128xf32>
    %4 = vector.broadcast %3 : vector<1x1x128xf32> to vector<8x1x128xf32>
    "tpu.trace_start"() <{level = 10 : i32, message = "tqh,tsh->tqs"}> : () -> ()
    %cst = arith.constant dense<0.000000e+00> : vector<8x1x16xf32>
    %5 = tpu.matmul %4, %0, %cst {dimension_numbers = #tpu.dot_dimension_numbers<[2], [2], [1], [1], [0, 0, 0, 1, 1, 1], [0], [0]>} : vector<8x1x128xf32>, vector<8x16x128xf32>, vector<8x1x16xf32> -> vector<8x1x16xf32>
    "tpu.trace_stop"() : () -> ()
    %cst_4 = arith.constant dense<0xFF800000> : vector<8x1xf32>
    %6 = vector.multi_reduction <maximumf>, %5, %cst_4 [2] : vector<8x1x16xf32> to vector<8x1xf32>
    %7 = vector.shape_cast %6 : vector<8x1xf32> to vector<8x1x1xf32>
    %8 = vector.broadcast %7 : vector<8x1x1xf32> to vector<8x1x16xf32>
    %9 = arith.subf %5, %8 : vector<8x1x16xf32>
    %10 = math.exp %9 : vector<8x1x16xf32>
    %cst_5 = arith.constant dense<0.000000e+00> : vector<8x1xf32>
    %11 = vector.multi_reduction <add>, %10, %cst_5 [2] : vector<8x1x16xf32> to vector<8x1xf32>
    %12 = vector.shape_cast %11 : vector<8x1xf32> to vector<8x1x1xf32>
    %13 = tpu.reciprocal %12 {approx = true} : vector<8x1x1xf32> -> vector<8x1x1xf32>
    %14 = vector.broadcast %13 : vector<8x1x1xf32> to vector<8x1x16xf32>
    %15 = arith.mulf %10, %14 : vector<8x1x16xf32>
    %c0_6 = arith.constant 0 : index
    %c0_7 = arith.constant 0 : index
    %16 = vector.load %arg2[%c0_6, %c0_7] : memref<8x16xf32, #tpu.memory_space<vmem>>, vector<8x16xf32>
    %17 = vector.shape_cast %16 : vector<8x16xf32> to vector<8x1x16xf32>
    %18 = arith.mulf %15, %17 : vector<8x1x16xf32>
    "tpu.trace_start"() <{level = 10 : i32, message = "tqs,tsh->tqh"}> : () -> ()
    %cst_8 = arith.constant dense<0.000000e+00> : vector<8x1x128xf32>
    %19 = tpu.matmul %18, %0, %cst_8 {dimension_numbers = #tpu.dot_dimension_numbers<[2], [1], [1], [2], [0, 0, 0, 1, 1, 2], [0], [0]>} : vector<8x1x16xf32>, vector<8x16x128xf32>, vector<8x1x128xf32> -> vector<8x1x128xf32>
    "tpu.trace_stop"() : () -> ()
    %20 = vector.shape_cast %19 : vector<8x1x128xf32> to vector<8x128xf32>
    %c0_9 = arith.constant 0 : index
    %c0_10 = arith.constant 0 : index
    %21 = vector.load %arg4[%c0_9, %c0_10] : memref<128x128xf32, #tpu.memory_space<vmem>>, vector<128x128xf32>
    %cst_11 = arith.constant dense<0.000000e+00> : vector<8x128xf32>
    %22 = tpu.matmul %20, %21, %cst_11 {dimension_numbers = #tpu.dot_dimension_numbers<[1], [0], [0], [1], [0, 0, 1, 1], [], []>} : vector<8x128xf32>, vector<128x128xf32>, vector<8x128xf32> -> vector<8x128xf32>
    %c0_12 = arith.constant 0 : index
    %c0_13 = arith.constant 0 : index
    %23 = vector.load %arg5[%c0_12, %c0_13] : memref<1x128xf32, #tpu.memory_space<vmem>>, vector<1x128xf32>
    %24 = vector.broadcast %23 : vector<1x128xf32> to vector<8x128xf32>
    %25 = arith.addf %22, %24 : vector<8x128xf32>
    %26 = math.tanh %25 : vector<8x128xf32>
    %c0_14 = arith.constant 0 : index
    %c0_15 = arith.constant 0 : index
    %27 = vector.load %arg6[%c0_14, %c0_15] : memref<128x4xf32, #tpu.memory_space<vmem>>, vector<128x4xf32>
    %cst_16 = arith.constant dense<0.000000e+00> : vector<8x4xf32>
    %28 = tpu.matmul %26, %27, %cst_16 {dimension_numbers = #tpu.dot_dimension_numbers<[1], [0], [0], [1], [0, 0, 1, 1], [], []>} : vector<8x128xf32>, vector<128x4xf32>, vector<8x4xf32> -> vector<8x4xf32>
    %c0_17 = arith.constant 0 : index
    %c0_18 = arith.constant 0 : index
    %29 = vector.load %arg7[%c0_17, %c0_18] : memref<1x4xf32, #tpu.memory_space<vmem>>, vector<1x4xf32>
    %30 = vector.broadcast %29 : vector<1x4xf32> to vector<8x4xf32>
    %31 = arith.addf %28, %30 : vector<8x4xf32>
    %c0_19 = arith.constant 0 : index
    %c0_20 = arith.constant 0 : index
    %32 = vector.load %arg8[%c0_19, %c0_20] : memref<8x4xf32, #tpu.memory_space<vmem>>, vector<8x4xf32>
    tpu.vector_store %arg8[%c0_19, %c0_20], %31 {strides = array<i32>} : memref<8x4xf32, #tpu.memory_space<vmem>>, vector<8x4xf32>,
    return
  }
  func.func @transform_0(%arg0: i32) -> (i32, i32, i32) {
    %c0_i32 = arith.constant 0 : i32
    %c0_i32_0 = arith.constant 0 : i32
    %c0_i32_1 = arith.constant 0 : i32
    return %arg0, %c0_i32, %c0_i32_0 : i32, i32, i32
  }
  func.func @transform_1(%arg0: i32) -> (i32, i32) {
    %c0_i32 = arith.constant 0 : i32
    %c0_i32_0 = arith.constant 0 : i32
    return %arg0, %c0_i32 : i32, i32
  }
  func.func @transform_2(%arg0: i32) -> (i32, i32) {
    %c0_i32 = arith.constant 0 : i32
    %c0_i32_0 = arith.constant 0 : i32
    %c0_i32_1 = arith.constant 0 : i32
    return %c0_i32, %c0_i32_0 : i32, i32
  }
  func.func @transform_3(%arg0: i32) -> (i32, i32) {
    %c0_i32 = arith.constant 0 : i32
    %c0_i32_0 = arith.constant 0 : i32
    %c0_i32_1 = arith.constant 0 : i32
    return %c0_i32, %c0_i32_0 : i32, i32
  }
  func.func @transform_4(%arg0: i32) -> (i32, i32) {
    %c0_i32 = arith.constant 0 : i32
    %c0_i32_0 = arith.constant 0 : i32
    %c0_i32_1 = arith.constant 0 : i32
    return %c0_i32, %c0_i32_0 : i32, i32
  }
  func.func @transform_5(%arg0: i32) -> (i32, i32) {
    %c0_i32 = arith.constant 0 : i32
    %c0_i32_0 = arith.constant 0 : i32
    %c0_i32_1 = arith.constant 0 : i32
    return %c0_i32, %c0_i32_0 : i32, i32
  }
  func.func @transform_6(%arg0: i32) -> (i32, i32) {
    %c0_i32 = arith.constant 0 : i32
    %c0_i32_0 = arith.constant 0 : i32
    %c0_i32_1 = arith.constant 0 : i32
    return %c0_i32, %c0_i32_0 : i32, i32
  }
  func.func @transform_7(%arg0: i32) -> (i32, i32) {
    %c0_i32 = arith.constant 0 : i32
    %c0_i32_0 = arith.constant 0 : i32
    return %arg0, %c0_i32 : i32, i32
  }
}

</mosaic_0001>

<llo_original>
// kernel: tpu_custom_call.1
$region0: #{tpu_custom_call.1}
  #allocation0 [shape = 'u32[]', space=smem, size = 0x4, offset = 0x4, fixed_abs, tag = 'smem constant byte address 0x4 - core index']
  #allocation1 [shape = 'u32[72,128]{1,0:T(1,128)}', space=vmem, size = 0x9000, scoped, tag = 'internal scratch']
  %s0 = inlined_call_operand.hbm [shape: f32[16,16,128], index: 0, kind: input, shape index: {}]
  %s1 = inlined_call_operand.hbm [shape: f32[16,16], index: 1, kind: input, shape index: {}]
  %s2 = inlined_call_operand.vmem [shape: f32[1,128], index: 2, kind: input, shape index: {}]
  %s3 = inlined_call_operand.vmem [shape: f32[128,128], index: 3, kind: input, shape index: {}]
  %s4 = inlined_call_operand.vmem [shape: f32[1,128], index: 4, kind: input, shape index: {}]
  %s5 = inlined_call_operand.vmem [shape: f32[128,4], index: 5, kind: input, shape index: {}]
  %s6 = inlined_call_operand.vmem [shape: f32[1,4], index: 6, kind: input, shape index: {}]
  %s7 = inlined_call_operand.vmem [shape: f32[16,4], index: 7, kind: output, shape index: {}]
  %s8 = sld [smem:[#allocation0]]
  $region69: #{tpu_custom_call.1} parent=0
    _
  %s10 = ssub.s32 1, %s8
  %s11 = scalar_select 0, %s10, %s8
  $region1: #{tpu_custom_call.1} parent=0
    #allocation2 [shape = 'u8[131072]{0}', space=vmem, size = 0x20000, scoped, tag = 'input window, operand 0']
    #allocation3 [shape = 's32[2]{0}', space=sflag, size = 0x8, scoped, tag = 'scoped memory for tpu_custom_call.1']
    #allocation4 [shape = 'u8[8192]{0}', space=vmem, size = 0x2000, scoped, tag = 'input window, operand 1']
    #allocation5 [shape = 's32[2]{0}', space=sflag, size = 0x8, scoped, tag = 'scoped memory for tpu_custom_call.1']
    %12 = vsyncpa [#allocation3], 0
    %s13 = scalar_lea.sflag [#allocation3], 1
    %14 = vsyncpa %s13, 0
    %15 = vsyncpa [#allocation5], 0
    %s16 = scalar_lea.sflag [#allocation5], 1
    %17 = vsyncpa %s16, 0
    loop: start=0, step=1, limit=4
    $region2: #{tpu_custom_call.1} parent=1 // loop_pre_header
      _
    $region3: #{tpu_custom_call.1} parent=1 // loop_header
      %s19 = sphi 0, %s23
      %p20 = scmp.ge.s32.totalorder %s19, 4
      %s29 = sphi 0, %s31
      %s32 = sphi 0, %s29
      %s33 = sphi 0, %s32
      %s49 = sphi 0, %s33
      %s55 = sphi 0, %s57
      %s58 = sphi 0, %s55
      %s59 = sphi 0, %s58
      %s75 = sphi 0, %s59
      %s79 = sphi 0, %s79
      %s81 = sphi 0, %s79
      %s82 = sphi 0, %s81
      %s96 = sphi 0, %s82
      %s100 = sphi 0, %s100
      %s102 = sphi 0, %s100
      %s103 = sphi 0, %s102
      %s117 = sphi 0, %s103
      %s121 = sphi 0, %s121
      %s123 = sphi 0, %s121
      %s124 = sphi 0, %s123
      %s138 = sphi 0, %s124
      %s142 = sphi 0, %s142
      %s144 = sphi 0, %s142
      %s145 = sphi 0, %s144
      %s159 = sphi 0, %s145
      %s163 = sphi 0, %s163
      %s165 = sphi 0, %s163
      %s166 = sphi 0, %s165
      %s180 = sphi 0, %s166
      %s186 = sphi 0, %s188
      %s189 = sphi 0, %s186
      %s190 = sphi 0, %s189
      %s206 = sphi 0, %s190
    $region4: #{tpu_custom_call.1} parent=1 // loop_header_branch
      %22 = sbr.rel (%p20) target = $region8
    $region5: #{tpu_custom_call.1} parent=1 // loop_body
      %s24 = ssub.s32 %s19, 1
      %s25 = ssub.s32 %s19, 2
      %s26 = sadd.s32 %s19, 1
      %s27 = ssub.s32 %s19, %s26
      %p28 = scmp.eq.s32.totalorder %s27, 0
      %s30 = sadd.s32 %s29, 1
      %s31 = scalar_select %p28, %s29, %s30
      %p34 = pneg %p28
      %p35 = scmp.eq.s32.totalorder %s19, 1
      %p36 = por %p34, %p35
      %p37 = scmp.ne.s32.totalorder %s29, %s32
      %p38 = scmp.eq.s32.totalorder %s19, 0
      %p39 = por %p37, %p38
      %p40 = scmp.ne.s32.totalorder %s29, %s32
      %p41 = scmp.eq.s32.totalorder %s24, 1
      %p42 = por %p40, %p41
      %p43 = scmp.ne.s32.totalorder %s32, %s33
      %p44 = scmp.eq.s32.totalorder %s24, 0
      %p45 = por %p43, %p44
      %p46 = scmp.ne.s32.totalorder %s32, %s33
      %p47 = scmp.eq.s32.totalorder %s25, 1
      %p48 = por %p46, %p47
      %p50 = scmp.ne.s32.totalorder %s33, %s49
      %p51 = scmp.eq.s32.totalorder %s25, 0
      %p52 = por %p50, %p51
      %s53 = ssub.s32 %s19, %s26
      %p54 = scmp.eq.s32.totalorder %s53, 0
      %s56 = sadd.s32 %s55, 1
      %s57 = scalar_select %p54, %s55, %s56
      %p60 = pneg %p54
      %p61 = scmp.eq.s32.totalorder %s19, 1
      %p62 = por %p60, %p61
      %p63 = scmp.ne.s32.totalorder %s55, %s58
      %p64 = scmp.eq.s32.totalorder %s19, 0
      %p65 = por %p63, %p64
      %p66 = scmp.ne.s32.totalorder %s55, %s58
      %p67 = scmp.eq.s32.totalorder %s24, 1
      %p68 = por %p66, %p67
      %p69 = scmp.ne.s32.totalorder %s58, %s59
      %p70 = scmp.eq.s32.totalorder %s24, 0
      %p71 = por %p69, %p70
      %p72 = scmp.ne.s32.totalorder %s58, %s59
      %p73 = scmp.eq.s32.totalorder %s25, 1
      %p74 = por %p72, %p73
      %p76 = scmp.ne.s32.totalorder %s59, %s75
      %p77 = scmp.eq.s32.totalorder %s25, 0
      %p78 = por %p76, %p77
      %s80 = sadd.s32 %s79, 1
      %p83 = scmp.eq.s32.totalorder %s19, 1
      %p84 = scmp.ne.s32.totalorder %s79, %s81
      %p85 = scmp.eq.s32.totalorder %s19, 0
      %p86 = por %p84, %p85
      %p87 = scmp.ne.s32.totalorder %s79, %s81
      %p88 = scmp.eq.s32.totalorder %s24, 1
      %p89 = por %p87, %p88
      %p90 = scmp.ne.s32.totalorder %s81, %s82
      %p91 = scmp.eq.s32.totalorder %s24, 0
      %p92 = por %p90, %p91
      %p93 = scmp.ne.s32.totalorder %s81, %s82
      %p94 = scmp.eq.s32.totalorder %s25, 1
      %p95 = por %p93, %p94
      %p97 = scmp.ne.s32.totalorder %s82, %s96
      %p98 = scmp.eq.s32.totalorder %s25, 0
      %p99 = por %p97, %p98
      %s101 = sadd.s32 %s100, 1
      %p104 = scmp.eq.s32.totalorder %s19, 1
      %p105 = scmp.ne.s32.totalorder %s100, %s102
      %p106 = scmp.eq.s32.totalorder %s19, 0
      %p107 = por %p105, %p106
      %p108 = scmp.ne.s32.totalorder %s100, %s102
      %p109 = scmp.eq.s32.totalorder %s24, 1
      %p110 = por %p108, %p109
      %p111 = scmp.ne.s32.totalorder %s102, %s103
      %p112 = scmp.eq.s32.totalorder %s24, 0
      %p113 = por %p111, %p112
      %p114 = scmp.ne.s32.totalorder %s102, %s103
      %p115 = scmp.eq.s32.totalorder %s25, 1
      %p116 = por %p114, %p115
      %p118 = scmp.ne.s32.totalorder %s103, %s117
      %p119 = scmp.eq.s32.totalorder %s25, 0
      %p120 = por %p118, %p119
      %s122 = sadd.s32 %s121, 1
      %p125 = scmp.eq.s32.totalorder %s19, 1
      %p126 = scmp.ne.s32.totalorder %s121, %s123
      %p127 = scmp.eq.s32.totalorder %s19, 0
      %p128 = por %p126, %p127
      %p129 = scmp.ne.s32.totalorder %s121, %s123
      %p130 = scmp.eq.s32.totalorder %s24, 1
      %p131 = por %p129, %p130
      %p132 = scmp.ne.s32.totalorder %s123, %s124
      %p133 = scmp.eq.s32.totalorder %s24, 0
      %p134 = por %p132, %p133
      %p135 = scmp.ne.s32.totalorder %s123, %s124
      %p136 = scmp.eq.s32.totalorder %s25, 1
      %p137 = por %p135, %p136
      %p139 = scmp.ne.s32.totalorder %s124, %s138
      %p140 = scmp.eq.s32.totalorder %s25, 0
      %p141 = por %p139, %p140
      %s143 = sadd.s32 %s142, 1
      %p146 = scmp.eq.s32.totalorder %s19, 1
      %p147 = scmp.ne.s32.totalorder %s142, %s144
      %p148 = scmp.eq.s32.totalorder %s19, 0
      %p149 = por %p147, %p148
      %p150 = scmp.ne.s32.totalorder %s142, %s144
      %p151 = scmp.eq.s32.totalorder %s24, 1
      %p152 = por %p150, %p151
      %p153 = scmp.ne.s32.totalorder %s144, %s145
      %p154 = scmp.eq.s32.totalorder %s24, 0
      %p155 = por %p153, %p154
      %p156 = scmp.ne.s32.totalorder %s144, %s145
      %p157 = scmp.eq.s32.totalorder %s25, 1
      %p158 = por %p156, %p157
      %p160 = scmp.ne.s32.totalorder %s145, %s159
      %p161 = scmp.eq.s32.totalorder %s25, 0
      %p162 = por %p160, %p161
      %s164 = sadd.s32 %s163, 1
      %p167 = scmp.eq.s32.totalorder %s19, 1
      %p168 = scmp.ne.s32.totalorder %s163, %s165
      %p169 = scmp.eq.s32.totalorder %s19, 0
      %p170 = por %p168, %p169
      %p171 = scmp.ne.s32.totalorder %s163, %s165
      %p172 = scmp.eq.s32.totalorder %s24, 1
      %p173 = por %p171, %p172
      %p174 = scmp.ne.s32.totalorder %s165, %s166
      %p175 = scmp.eq.s32.totalorder %s24, 0
      %p176 = por %p174, %p175
      %p177 = scmp.ne.s32.totalorder %s165, %s166
      %p178 = scmp.eq.s32.totalorder %s25, 1
      %p179 = por %p177, %p178
      %p181 = scmp.ne.s32.totalorder %s166, %s180
      %p182 = scmp.eq.s32.totalorder %s25, 0
      %p183 = por %p181, %p182
      %s184 = ssub.s32 %s19, %s26
      %p185 = scmp.eq.s32.totalorder %s184, 0
      %s187 = sadd.s32 %s186, 1
      %s188 = scalar_select %p185, %s186, %s187
      %p191 = pneg %p185
      %p192 = scmp.eq.s32.totalorder %s19, 1
      %p193 = por %p191, %p192
      %p194 = scmp.ne.s32.totalorder %s186, %s189
      %p195 = scmp.eq.s32.totalorder %s19, 0
      %p196 = por %p194, %p195
      %p197 = scmp.ne.s32.totalorder %s186, %s189
      %p198 = scmp.eq.s32.totalorder %s24, 1
      %p199 = por %p197, %p198
      %p200 = scmp.ne.s32.totalorder %s189, %s190
      %p201 = scmp.eq.s32.totalorder %s24, 0
      %p202 = por %p200, %p201
      %p203 = scmp.ne.s32.totalorder %s189, %s190
      %p204 = scmp.eq.s32.totalorder %s25, 1
      %p205 = por %p203, %p204
      %p207 = scmp.ne.s32.totalorder %s190, %s206
      %p208 = scmp.eq.s32.totalorder %s25, 0
      %p209 = por %p207, %p208
      %p210 = scmp.le.s32.totalorder 1, %s19
      %p211 = scmp.lt.s32.totalorder %s19, 3
      %p212 = pnand %p210, %p211
      %p213 = pneg %p212
      // Predicated region
      $region9: #{tpu_custom_call.1} parent=5 // pred_check
        _
      $region10: #{tpu_custom_call.1} parent=5 // pred_check_branch
        %215 = sbr.rel (%p212) target = $region12
      $region11: #{tpu_custom_call.1} parent=5 // pred_region
        %s216 = ssub.s32 %s19, 1
        // Predicated region
        $region13: #{tpu_custom_call.1} parent=11 // pred_check
          %p217 = pneg %p92
        $region14: #{tpu_custom_call.1} parent=11 // pred_check_branch
          %219 = sbr.rel (%p217) target = $region16
        $region15: #{tpu_custom_call.1} parent=11 // pred_region
          _
        $region16: #{tpu_custom_call.1} parent=11 // pred_fallthru
          _
        // Predicated region
        $region17: #{tpu_custom_call.1} parent=11 // pred_check
          %p220 = pneg %p113
        $region18: #{tpu_custom_call.1} parent=11 // pred_check_branch
          %222 = sbr.rel (%p220) target = $region20
        $region19: #{tpu_custom_call.1} parent=11 // pred_region
          _
        $region20: #{tpu_custom_call.1} parent=11 // pred_fallthru
          _
        // Predicated region
        $region21: #{tpu_custom_call.1} parent=11 // pred_check
          %p223 = pneg %p134
        $region22: #{tpu_custom_call.1} parent=11 // pred_check_branch
          %225 = sbr.rel (%p223) target = $region24
        $region23: #{tpu_custom_call.1} parent=11 // pred_region
          _
        $region24: #{tpu_custom_call.1} parent=11 // pred_fallthru
          _
        // Predicated region
        $region25: #{tpu_custom_call.1} parent=11 // pred_check
          %p226 = pneg %p155
        $region26: #{tpu_custom_call.1} parent=11 // pred_check_branch
          %228 = sbr.rel (%p226) target = $region28
        $region27: #{tpu_custom_call.1} parent=11 // pred_region
          _
        $region28: #{tpu_custom_call.1} parent=11 // pred_fallthru
          _
        // Predicated region
        $region29: #{tpu_custom_call.1} parent=11 // pred_check
          %p229 = pneg %p176
        $region30: #{tpu_custom_call.1} parent=11 // pred_check_branch
          %231 = sbr.rel (%p229) target = $region32
        $region31: #{tpu_custom_call.1} parent=11 // pred_region
          _
        $region32: #{tpu_custom_call.1} parent=11 // pred_fallthru
          _
      $region12: #{tpu_custom_call.1} parent=5 // pred_fallthru
        _
      %p232 = scmp.lt.s32.totalorder %s19, 2
      // Predicated region
      $region33: #{tpu_custom_call.1} parent=5 // pred_check
        %p233 = pneg %p232
      $region34: #{tpu_custom_call.1} parent=5 // pred_check_branch
        %235 = sbr.rel (%p233) target = $region36
      $region35: #{tpu_custom_call.1} parent=5 // pred_region
        // Predicated region
        $region37: #{tpu_custom_call.1} parent=35 // pred_check
          %p236 = pneg %p39
        $region38: #{tpu_custom_call.1} parent=35 // pred_check_branch
          %238 = sbr.rel (%p236) target = $region40
        $region39: #{tpu_custom_call.1} parent=35 // pred_region
          %s239 = sand.u32 %s29, 1
          %s240 = scalar_lea.sflag [#allocation3], %s239
          %s241 = sand.u32 %s29, 1
          %s242 = smul.addr %s241, 128
          %s243 = scalar_lea.vmem [#allocation2], %s242
          %s244 = smul.u32 8, %s19
          %246 = vsyncadd %s240, 0
          %s247 = smul.addr %s244, 2
          %s248 = smul.addr %s247, 8
          %s249 = scalar_lea.hbm %s0, %s248
          %s250 = sshll.u32 %s249, 4
          %s251 = int_to_ptr.hbm [resolvable:$true] %s250
          %s252 = sshll.u32 %s243, 4
          %s253 = int_to_ptr.vmem [resolvable:$true] %s252
          %258 = dma.hbm_to_vmem [thread:$0]  %s251, 2048, %s253, %s240, 128, 128, 8
        $region40: #{tpu_custom_call.1} parent=35 // pred_fallthru
          _
        // Predicated region
        $region41: #{tpu_custom_call.1} parent=35 // pred_check
          %p259 = pneg %p65
        $region42: #{tpu_custom_call.1} parent=35 // pred_check_branch
          %261 = sbr.rel (%p259) target = $region44
        $region43: #{tpu_custom_call.1} parent=35 // pred_region
          %s262 = sand.u32 %s55, 1
          %s263 = scalar_lea.sflag [#allocation5], %s262
          %s264 = sand.u32 %s55, 1
          %s265 = smul.addr %s264, 8
          %s266 = scalar_lea.vmem [#allocation4], %s265
          %268 = vsyncadd %s263, 0
          %s269 = smul.addr %s19, 8
          %s270 = scalar_lea.hbm %s1, %s269
          %s272 = sshll.u32 %s270, 4
          %s273 = int_to_ptr.hbm [resolvable:$true] %s272
          %s274 = sshll.u32 %s266, 4
          %s275 = int_to_ptr.vmem [resolvable:$true] %s274
          %277 = dma.hbm_to_vmem [thread:$0]  %s273, 128, %s275, %s263
        $region44: #{tpu_custom_call.1} parent=35 // pred_fallthru
          _
      $region36: #{tpu_custom_call.1} parent=5 // pred_fallthru
        _
      %p278 = scmp.le.s32.totalorder 1, %s19
      %p279 = scmp.lt.s32.totalorder %s19, 3
      %p280 = pnand %p278, %p279
      %p281 = pneg %p280
      // Predicated region
      $region45: #{tpu_custom_call.1} parent=5 // pred_check
        _
      $region46: #{tpu_custom_call.1} parent=5 // pred_check_branch
        %283 = sbr.rel (%p280) target = $region48
      $region47: #{tpu_custom_call.1} parent=5 // pred_region
        %s284 = ssub.s32 %s19, 1
        %s285 = sand.u32 %s32, 1
        %s286 = scalar_lea.sflag [#allocation3], %s285
        %s287 = sand.u32 %s32, 1
        %s288 = smul.addr %s287, 128
        %s289 = scalar_lea.vmem [#allocation2], %s288
        // Predicated region
        $region49: #{tpu_custom_call.1} parent=47 // pred_check
          %p290 = pneg %p45
        $region50: #{tpu_custom_call.1} parent=47 // pred_check_branch
          %292 = sbr.rel (%p290) target = $region52
        $region51: #{tpu_custom_call.1} parent=47 // pred_region
          %294 = dma.done %s286, 2048
        $region52: #{tpu_custom_call.1} parent=47 // pred_fallthru
          _
        %s295 = sand.u32 %s58, 1
        %s296 = scalar_lea.sflag [#allocation5], %s295
        %s297 = sand.u32 %s58, 1
        %s298 = smul.addr %s297, 8
        %s299 = scalar_lea.vmem [#allocation4], %s298
        // Predicated region
        $region53: #{tpu_custom_call.1} parent=47 // pred_check
          %p300 = pneg %p71
        $region54: #{tpu_custom_call.1} parent=47 // pred_check_branch
          %302 = sbr.rel (%p300) target = $region56
        $region55: #{tpu_custom_call.1} parent=47 // pred_region
          %304 = dma.done %s296, 128
        $region56: #{tpu_custom_call.1} parent=47 // pred_fallthru
          _
        %s305 = sand.u32 %s32, 1
        %s306 = scalar_lea.sflag [#allocation3], %s305
        %s307 = sand.u32 %s32, 1
        %s308 = smul.addr %s307, 128
        %s309 = scalar_lea.vmem [#allocation2], %s308
        %p310 = pneg %p45
        %p311 = pneg %p42
        %s312 = sand.u32 %s58, 1
        %s313 = scalar_lea.sflag [#allocation5], %s312
        %s314 = sand.u32 %s58, 1
        %s315 = smul.addr %s314, 8
        %s316 = scalar_lea.vmem [#allocation4], %s315
        %p317 = pneg %p71
        %p318 = pneg %p68
        %p319 = pneg %p92
        %p320 = pneg %p89
        %p321 = pneg %p113
        %p322 = pneg %p110
        %p323 = pneg %p134
        %p324 = pneg %p131
        %p325 = pneg %p155
        %p326 = pneg %p152
        %p327 = pneg %p176
        %p328 = pneg %p173
        %p329 = pneg %p202
        %p330 = pneg %p199
        %p331 = scmp.lt.s32.totalorder %s24, 1
        %s332 = scalar_select %p331, %s24, 1
        %s333 = smul.addr %s332, 8
        %s334 = scalar_lea.vmem %s7, %s333
        %s335 = smul.u32 8, %s24
        %p336 = scmp.lt.s32.totalorder %s24, 1
        %s337 = scalar_select %p336, %s24, 1
        %s338 = smul.addr %s337, 8
        %s339 = scalar_lea.vmem %s7, %s338
        %v340 = vld [vmem:[%s289] sm:$0xff]
        %v341 = vld [vmem:[%s289 + $0x8] sm:$0xff]
        %v342 = vld [vmem:[%s289 + $0x10] sm:$0xff]
        %v343 = vld [vmem:[%s289 + $0x18] sm:$0xff]
        %v344 = vld [vmem:[%s289 + $0x20] sm:$0xff]
        %v345 = vld [vmem:[%s289 + $0x28] sm:$0xff]
        %v346 = vld [vmem:[%s289 + $0x30] sm:$0xff]
        %v347 = vld [vmem:[%s289 + $0x38] sm:$0xff]
        %v348 = vld [vmem:[%s289 + $0x40] sm:$0xff]
        %v349 = vld [vmem:[%s289 + $0x48] sm:$0xff]
        %v350 = vld [vmem:[%s289 + $0x50] sm:$0xff]
        %v351 = vld [vmem:[%s289 + $0x58] sm:$0xff]
        %v352 = vld [vmem:[%s289 + $0x60] sm:$0xff]
        %v353 = vld [vmem:[%s289 + $0x68] sm:$0xff]
        %v354 = vld [vmem:[%s289 + $0x70] sm:$0xff]
        %v355 = vld [vmem:[%s289 + $0x78] sm:$0xff]
        %v356 = vld [vmem:[%s2] sm:$0x1]
        %357 = vmatpush.xpose.msra.mxu0 0.0
        %358 = vmatpush.xpose.msra.mxu0 0.0
        %359 = vmatpush.xpose.msra.mxu0 0.0
        %360 = vmatpush.xpose.msra.mxu0 0.0
        %361 = vmatpush.xpose.msra.mxu0 0.0
        %362 = vmatpush.xpose.msra.mxu0 0.0
        %363 = vmatpush.xpose.msra.mxu0 0.0
        %364 = vmatpush.xpose.msra.mxu0 0.0
        %365 = vmatpush.xpose.msra.mxu0 0.0
        %366 = vmatpush.xpose.msra.mxu0 0.0
        %367 = vmatpush.xpose.msra.mxu0 0.0
        %368 = vmatpush.xpose.msra.mxu0 0.0
        %369 = vmatpush.xpose.msra.mxu0 0.0
        %370 = vmatpush.xpose.msra.mxu0 0.0
        %371 = vmatpush.xpose.msra.mxu0 %v341
        %372 = vmatpush.xpose.msra.mxu0 %v340
        %373 = vmatmul.f32.gmra.mxu0 %v356
        %v374 = vpop.f32.mrf.mxu0
        %v375 = vadd.f32 0.0, %v374
        %376 = vdwg.mxu0
        %377 = vmatpush.xpose.msra.mxu0 0.0
        %378 = vmatpush.xpose.msra.mxu0 0.0
        %379 = vmatpush.xpose.msra.mxu0 0.0
        %380 = vmatpush.xpose.msra.mxu0 0.0
        %381 = vmatpush.xpose.msra.mxu0 0.0
        %382 = vmatpush.xpose.msra.mxu0 0.0
        %383 = vmatpush.xpose.msra.mxu0 0.0
        %384 = vmatpush.xpose.msra.mxu0 0.0
        %385 = vmatpush.xpose.msra.mxu0 0.0
        %386 = vmatpush.xpose.msra.mxu0 0.0
        %387 = vmatpush.xpose.msra.mxu0 0.0
        %388 = vmatpush.xpose.msra.mxu0 0.0
        %389 = vmatpush.xpose.msra.mxu0 0.0
        %390 = vmatpush.xpose.msra.mxu0 0.0
        %391 = vmatpush.xpose.msra.mxu0 %v343
        %392 = vmatpush.xpose.msra.mxu0 %v342
        %393 = vmatmul.f32.gmra.mxu0 %v356
        %v394 = vpop.f32.mrf.mxu0
        %v395 = vadd.f32 0.0, %v394
        %396 = vdwg.mxu0
        %397 = vmatpush.xpose.msra.mxu0 0.0
        %398 = vmatpush.xpose.msra.mxu0 0.0
        %399 = vmatpush.xpose.msra.mxu0 0.0
        %400 = vmatpush.xpose.msra.mxu0 0.0
        %401 = vmatpush.xpose.msra.mxu0 0.0
        %402 = vmatpush.xpose.msra.mxu0 0.0
        %403 = vmatpush.xpose.msra.mxu0 0.0
        %404 = vmatpush.xpose.msra.mxu0 0.0
        %405 = vmatpush.xpose.msra.mxu0 0.0
        %406 = vmatpush.xpose.msra.mxu0 0.0
        %407 = vmatpush.xpose.msra.mxu0 0.0
        %408 = vmatpush.xpose.msra.mxu0 0.0
        %409 = vmatpush.xpose.msra.mxu0 0.0
        %410 = vmatpush.xpose.msra.mxu0 0.0
        %411 = vmatpush.xpose.msra.mxu0 %v345
        %412 = vmatpush.xpose.msra.mxu0 %v344
        %413 = vmatmul.f32.gmra.mxu0 %v356
        %v414 = vpop.f32.mrf.mxu0
        %v415 = vadd.f32 0.0, %v414
        %416 = vdwg.mxu0
        %417 = vmatpush.xpose.msra.mxu0 0.0
        %418 = vmatpush.xpose.msra.mxu0 0.0
        %419 = vmatpush.xpose.msra.mxu0 0.0
        %420 = vmatpush.xpose.msra.mxu0 0.0
        %421 = vmatpush.xpose.msra.mxu0 0.0
        %422 = vmatpush.xpose.msra.mxu0 0.0
        %423 = vmatpush.xpose.msra.mxu0 0.0
        %424 = vmatpush.xpose.msra.mxu0 0.0
        %425 = vmatpush.xpose.msra.mxu0 0.0
        %426 = vmatpush.xpose.msra.mxu0 0.0
        %427 = vmatpush.xpose.msra.mxu0 0.0
        %428 = vmatpush.xpose.msra.mxu0 0.0
        %429 = vmatpush.xpose.msra.mxu0 0.0
        %430 = vmatpush.xpose.msra.mxu0 0.0
        %431 = vmatpush.xpose.msra.mxu0 %v347
        %432 = vmatpush.xpose.msra.mxu0 %v346
        %433 = vmatmul.f32.gmra.mxu0 %v356
        %v434 = vpop.f32.mrf.mxu0
        %v435 = vadd.f32 0.0, %v434
        %436 = vdwg.mxu0
        %437 = vmatpush.xpose.msra.mxu0 0.0
        %438 = vmatpush.xpose.msra.mxu0 0.0
        %439 = vmatpush.xpose.msra.mxu0 0.0
        %440 = vmatpush.xpose.msra.mxu0 0.0
        %441 = vmatpush.xpose.msra.mxu0 0.0
        %442 = vmatpush.xpose.msra.mxu0 0.0
        %443 = vmatpush.xpose.msra.mxu0 0.0
        %444 = vmatpush.xpose.msra.mxu0 0.0
        %445 = vmatpush.xpose.msra.mxu0 0.0
        %446 = vmatpush.xpose.msra.mxu0 0.0
        %447 = vmatpush.xpose.msra.mxu0 0.0
        %448 = vmatpush.xpose.msra.mxu0 0.0
        %449 = vmatpush.xpose.msra.mxu0 0.0
        %450 = vmatpush.xpose.msra.mxu0 0.0
        %451 = vmatpush.xpose.msra.mxu0 %v349
        %452 = vmatpush.xpose.msra.mxu0 %v348
        %453 = vmatmul.f32.gmra.mxu0 %v356
        %v454 = vpop.f32.mrf.mxu0
        %v455 = vadd.f32 0.0, %v454
        %456 = vdwg.mxu0
        %457 = vmatpush.xpose.msra.mxu0 0.0
        %458 = vmatpush.xpose.msra.mxu0 0.0
        %459 = vmatpush.xpose.msra.mxu0 0.0
        %460 = vmatpush.xpose.msra.mxu0 0.0
        %461 = vmatpush.xpose.msra.mxu0 0.0
        %462 = vmatpush.xpose.msra.mxu0 0.0
        %463 = vmatpush.xpose.msra.mxu0 0.0
        %464 = vmatpush.xpose.msra.mxu0 0.0
        %465 = vmatpush.xpose.msra.mxu0 0.0
        %466 = vmatpush.xpose.msra.mxu0 0.0
        %467 = vmatpush.xpose.msra.mxu0 0.0
        %468 = vmatpush.xpose.msra.mxu0 0.0
        %469 = vmatpush.xpose.msra.mxu0 0.0
        %470 = vmatpush.xpose.msra.mxu0 0.0
        %471 = vmatpush.xpose.msra.mxu0 %v351
        %472 = vmatpush.xpose.msra.mxu0 %v350
        %473 = vmatmul.f32.gmra.mxu0 %v356
        %v474 = vpop.f32.mrf.mxu0
        %v475 = vadd.f32 0.0, %v474
        %476 = vdwg.mxu0
        %477 = vmatpush.xpose.msra.mxu0 0.0
        %478 = vmatpush.xpose.msra.mxu0 0.0
        %479 = vmatpush.xpose.msra.mxu0 0.0
        %480 = vmatpush.xpose.msra.mxu0 0.0
        %481 = vmatpush.xpose.msra.mxu0 0.0
        %482 = vmatpush.xpose.msra.mxu0 0.0
        %483 = vmatpush.xpose.msra.mxu0 0.0
        %484 = vmatpush.xpose.msra.mxu0 0.0
        %485 = vmatpush.xpose.msra.mxu0 0.0
        %486 = vmatpush.xpose.msra.mxu0 0.0
        %487 = vmatpush.xpose.msra.mxu0 0.0
        %488 = vmatpush.xpose.msra.mxu0 0.0
        %489 = vmatpush.xpose.msra.mxu0 0.0
        %490 = vmatpush.xpose.msra.mxu0 0.0
        %491 = vmatpush.xpose.msra.mxu0 %v353
        %492 = vmatpush.xpose.msra.mxu0 %v352
        %493 = vmatmul.f32.gmra.mxu0 %v356
        %v494 = vpop.f32.mrf.mxu0
        %v495 = vadd.f32 0.0, %v494
        %496 = vdwg.mxu0
        %497 = vmatpush.xpose.msra.mxu0 0.0
        %498 = vmatpush.xpose.msra.mxu0 0.0
        %499 = vmatpush.xpose.msra.mxu0 0.0
        %500 = vmatpush.xpose.msra.mxu0 0.0
        %501 = vmatpush.xpose.msra.mxu0 0.0
        %502 = vmatpush.xpose.msra.mxu0 0.0
        %503 = vmatpush.xpose.msra.mxu0 0.0
        %504 = vmatpush.xpose.msra.mxu0 0.0
        %505 = vmatpush.xpose.msra.mxu0 0.0
        %506 = vmatpush.xpose.msra.mxu0 0.0
        %507 = vmatpush.xpose.msra.mxu0 0.0
        %508 = vmatpush.xpose.msra.mxu0 0.0
        %509 = vmatpush.xpose.msra.mxu0 0.0
        %510 = vmatpush.xpose.msra.mxu0 0.0
        %511 = vmatpush.xpose.msra.mxu0 %v355
        %512 = vmatpush.xpose.msra.mxu0 %v354
        %513 = vmatmul.f32.gmra.mxu0 %v356
        %v514 = vpop.f32.mrf.mxu0
        %v515 = vadd.f32 0.0, %v514
        %516 = vdwg.mxu0
        %vm517 = vcmask 122880
        %v518 = vsel %vm517, %v375, -inf
        %519 = vmax.xlane.f32.xlu0 %v518
        %v520 = vpop.xlane.xlu0 %519
        %v521 = vsel %vm517, %v395, -inf
        %522 = vmax.xlane.f32.xlu0 %v521
        %v523 = vpop.xlane.xlu0 %522
        %v524 = vsel %vm517, %v415, -inf
        %525 = vmax.xlane.f32.xlu0 %v524
        %v526 = vpop.xlane.xlu0 %525
        %v527 = vsel %vm517, %v435, -inf
        %528 = vmax.xlane.f32.xlu0 %v527
        %v529 = vpop.xlane.xlu0 %528
        %v530 = vsel %vm517, %v455, -inf
        %531 = vmax.xlane.f32.xlu0 %v530
        %v532 = vpop.xlane.xlu0 %531
        %v533 = vsel %vm517, %v475, -inf
        %534 = vmax.xlane.f32.xlu0 %v533
        %v535 = vpop.xlane.xlu0 %534
        %v536 = vsel %vm517, %v495, -inf
        %537 = vmax.xlane.f32.xlu0 %v536
        %v538 = vpop.xlane.xlu0 %537
        %v539 = vsel %vm517, %v515, -inf
        %540 = vmax.xlane.f32.xlu0 %v539
        %v541 = vpop.xlane.xlu0 %540
        %v542 = vsub.f32 %v375, %v520
        %v543 = vsub.f32 %v395, %v523
        %v544 = vsub.f32 %v415, %v526
        %v545 = vsub.f32 %v435, %v529
        %v546 = vsub.f32 %v455, %v532
        %v547 = vsub.f32 %v475, %v535
        %v548 = vsub.f32 %v495, %v538
        %v549 = vsub.f32 %v515, %v541
        %v550 = vmul.f32 %v542, 1.442695
        %v551 = vpow.pop %v550
        %v552 = vmul.f32 %v543, 1.442695
        %v553 = vpow.pop %v552
        %v554 = vmul.f32 %v544, 1.442695
        %v555 = vpow.pop %v554
        %v556 = vmul.f32 %v545, 1.442695
        %v557 = vpow.pop %v556
        %v558 = vmul.f32 %v546, 1.442695
        %v559 = vpow.pop %v558
        %v560 = vmul.f32 %v547, 1.442695
        %v561 = vpow.pop %v560
        %v562 = vmul.f32 %v548, 1.442695
        %v563 = vpow.pop %v562
        %v564 = vmul.f32 %v549, 1.442695
        %v565 = vpow.pop %v564
        %v566 = vsel %vm517, %v551, 0.0
        %567 = vadd.xlane.f32.xlu0 %v566
        %v568 = vpop.xlane.xlu0 %567
        %v569 = vsel %vm517, %v553, 0.0
        %570 = vadd.xlane.f32.xlu0 %v569
        %v571 = vpop.xlane.xlu0 %570
        %v572 = vsel %vm517, %v555, 0.0
        %573 = vadd.xlane.f32.xlu0 %v572
        %v574 = vpop.xlane.xlu0 %573
        %v575 = vsel %vm517, %v557, 0.0
        %576 = vadd.xlane.f32.xlu0 %v575
        %v577 = vpop.xlane.xlu0 %576
        %v578 = vsel %vm517, %v559, 0.0
        %579 = vadd.xlane.f32.xlu0 %v578
        %v580 = vpop.xlane.xlu0 %579
        %v581 = vsel %vm517, %v561, 0.0
        %582 = vadd.xlane.f32.xlu0 %v581
        %v583 = vpop.xlane.xlu0 %582
        %v584 = vsel %vm517, %v563, 0.0
        %585 = vadd.xlane.f32.xlu0 %v584
        %v586 = vpop.xlane.xlu0 %585
        %v587 = vsel %vm517, %v565, 0.0
        %588 = vadd.xlane.f32.xlu0 %v587
        %v589 = vpop.xlane.xlu0 %588
        %v590 = vrcp.pop %v568
        %v591 = vrcp.pop %v571
        %v592 = vrcp.pop %v574
        %v593 = vrcp.pop %v577
        %v594 = vrcp.pop %v580
        %v595 = vrcp.pop %v583
        %v596 = vrcp.pop %v586
        %v597 = vrcp.pop %v589
        %v598 = vmul.f32 %v551, %v590
        %v599 = vmul.f32 %v553, %v591
        %v600 = vmul.f32 %v555, %v592
        %v601 = vmul.f32 %v557, %v593
        %v602 = vmul.f32 %v559, %v594
        %v603 = vmul.f32 %v561, %v595
        %v604 = vmul.f32 %v563, %v596
        %v605 = vmul.f32 %v565, %v597
        %v606 = vld [vmem:[%s299] sm:$0xff]
        %v608 = vrot.slane %v606, 1
        %v609 = vrot.slane %v606, 2
        %v610 = vrot.slane %v606, 3
        %v611 = vrot.slane %v606, 4
        %v612 = vrot.slane %v606, 5
        %v613 = vrot.slane %v606, 6
        %v614 = vrot.slane %v606, 7
        %v622 = vmul.f32 %v598, %v606
        %v623 = vmul.f32 %v599, %v608
        %v624 = vmul.f32 %v600, %v609
        %v625 = vmul.f32 %v601, %v610
        %v626 = vmul.f32 %v602, %v611
        %v627 = vmul.f32 %v603, %v612
        %v628 = vmul.f32 %v604, %v613
        %v629 = vmul.f32 %v605, %v614
        %vm630 = vcmask 130048
        %v632 = vsel %vm630, %v622, 0
        %634 = vmatpush.msra.mxu0 0.0
        %635 = vmatpush.msra.mxu0 0.0
        %636 = vmatpush.msra.mxu0 0.0
        %637 = vmatpush.msra.mxu0 0.0
        %638 = vmatpush.msra.mxu0 0.0
        %639 = vmatpush.msra.mxu0 0.0
        %640 = vmatpush.msra.mxu0 0.0
        %641 = vmatpush.msra.mxu0 0.0
        %642 = vmatpush.msra.mxu0 0.0
        %643 = vmatpush.msra.mxu0 0.0
        %644 = vmatpush.msra.mxu0 0.0
        %645 = vmatpush.msra.mxu0 0.0
        %646 = vmatpush.msra.mxu0 0.0
        %647 = vmatpush.msra.mxu0 0.0
        %648 = vmatpush.msra.mxu0 %v341
        %649 = vmatpush.msra.mxu0 %v340
        %650 = vmatmul.f32.gmra.mxu0 %v632
        %v651 = vpop.f32.mrf.mxu0
        %v652 = vadd.f32 0.0, %v651
        %653 = vdwg.mxu0
        %v655 = vsel %vm630, %v623, 0
        %657 = vmatpush.msra.mxu0 0.0
        %658 = vmatpush.msra.mxu0 0.0
        %659 = vmatpush.msra.mxu0 0.0
        %660 = vmatpush.msra.mxu0 0.0
        %661 = vmatpush.msra.mxu0 0.0
        %662 = vmatpush.msra.mxu0 0.0
        %663 = vmatpush.msra.mxu0 0.0
        %664 = vmatpush.msra.mxu0 0.0
        %665 = vmatpush.msra.mxu0 0.0
        %666 = vmatpush.msra.mxu0 0.0
        %667 = vmatpush.msra.mxu0 0.0
        %668 = vmatpush.msra.mxu0 0.0
        %669 = vmatpush.msra.mxu0 0.0
        %670 = vmatpush.msra.mxu0 0.0
        %671 = vmatpush.msra.mxu0 %v343
        %672 = vmatpush.msra.mxu0 %v342
        %673 = vmatmul.f32.gmra.mxu0 %v655
        %v674 = vpop.f32.mrf.mxu0
        %v675 = vadd.f32 0.0, %v674
        %676 = vdwg.mxu0
        %v678 = vsel %vm630, %v624, 0
        %680 = vmatpush.msra.mxu0 0.0
        %681 = vmatpush.msra.mxu0 0.0
        %682 = vmatpush.msra.mxu0 0.0
        %683 = vmatpush.msra.mxu0 0.0
        %684 = vmatpush.msra.mxu0 0.0
        %685 = vmatpush.msra.mxu0 0.0
        %686 = vmatpush.msra.mxu0 0.0
        %687 = vmatpush.msra.mxu0 0.0
        %688 = vmatpush.msra.mxu0 0.0
        %689 = vmatpush.msra.mxu0 0.0
        %690 = vmatpush.msra.mxu0 0.0
        %691 = vmatpush.msra.mxu0 0.0
        %692 = vmatpush.msra.mxu0 0.0
        %693 = vmatpush.msra.mxu0 0.0
        %694 = vmatpush.msra.mxu0 %v345
        %695 = vmatpush.msra.mxu0 %v344
        %696 = vmatmul.f32.gmra.mxu0 %v678
        %v697 = vpop.f32.mrf.mxu0
        %v698 = vadd.f32 0.0, %v697
        %699 = vdwg.mxu0
        %v701 = vsel %vm630, %v625, 0
        %703 = vmatpush.msra.mxu0 0.0
        %704 = vmatpush.msra.mxu0 0.0
        %705 = vmatpush.msra.mxu0 0.0
        %706 = vmatpush.msra.mxu0 0.0
        %707 = vmatpush.msra.mxu0 0.0
        %708 = vmatpush.msra.mxu0 0.0
        %709 = vmatpush.msra.mxu0 0.0
        %710 = vmatpush.msra.mxu0 0.0
        %711 = vmatpush.msra.mxu0 0.0
        %712 = vmatpush.msra.mxu0 0.0
        %713 = vmatpush.msra.mxu0 0.0
        %714 = vmatpush.msra.mxu0 0.0
        %715 = vmatpush.msra.mxu0 0.0
        %716 = vmatpush.msra.mxu0 0.0
        %717 = vmatpush.msra.mxu0 %v347
        %718 = vmatpush.msra.mxu0 %v346
        %719 = vmatmul.f32.gmra.mxu0 %v701
        %v720 = vpop.f32.mrf.mxu0
        %v721 = vadd.f32 0.0, %v720
        %722 = vdwg.mxu0
        %v724 = vsel %vm630, %v626, 0
        %726 = vmatpush.msra.mxu0 0.0
        %727 = vmatpush.msra.mxu0 0.0
        %728 = vmatpush.msra.mxu0 0.0
        %729 = vmatpush.msra.mxu0 0.0
        %730 = vmatpush.msra.mxu0 0.0
        %731 = vmatpush.msra.mxu0 0.0
        %732 = vmatpush.msra.mxu0 0.0
        %733 = vmatpush.msra.mxu0 0.0
        %734 = vmatpush.msra.mxu0 0.0
        %735 = vmatpush.msra.mxu0 0.0
        %736 = vmatpush.msra.mxu0 0.0
        %737 = vmatpush.msra.mxu0 0.0
        %738 = vmatpush.msra.mxu0 0.0
        %739 = vmatpush.msra.mxu0 0.0
        %740 = vmatpush.msra.mxu0 %v349
        %741 = vmatpush.msra.mxu0 %v348
        %742 = vmatmul.f32.gmra.mxu0 %v724
        %v743 = vpop.f32.mrf.mxu0
        %v744 = vadd.f32 0.0, %v743
        %745 = vdwg.mxu0
        %v747 = vsel %vm630, %v627, 0
        %749 = vmatpush.msra.mxu0 0.0
        %750 = vmatpush.msra.mxu0 0.0
        %751 = vmatpush.msra.mxu0 0.0
        %752 = vmatpush.msra.mxu0 0.0
        %753 = vmatpush.msra.mxu0 0.0
        %754 = vmatpush.msra.mxu0 0.0
        %755 = vmatpush.msra.mxu0 0.0
        %756 = vmatpush.msra.mxu0 0.0
        %757 = vmatpush.msra.mxu0 0.0
        %758 = vmatpush.msra.mxu0 0.0
        %759 = vmatpush.msra.mxu0 0.0
        %760 = vmatpush.msra.mxu0 0.0
        %761 = vmatpush.msra.mxu0 0.0
        %762 = vmatpush.msra.mxu0 0.0
        %763 = vmatpush.msra.mxu0 %v351
        %764 = vmatpush.msra.mxu0 %v350
        %765 = vmatmul.f32.gmra.mxu0 %v747
        %v766 = vpop.f32.mrf.mxu0
        %v767 = vadd.f32 0.0, %v766
        %768 = vdwg.mxu0
        %v770 = vsel %vm630, %v628, 0
        %772 = vmatpush.msra.mxu0 0.0
        %773 = vmatpush.msra.mxu0 0.0
        %774 = vmatpush.msra.mxu0 0.0
        %775 = vmatpush.msra.mxu0 0.0
        %776 = vmatpush.msra.mxu0 0.0
        %777 = vmatpush.msra.mxu0 0.0
        %778 = vmatpush.msra.mxu0 0.0
        %779 = vmatpush.msra.mxu0 0.0
        %780 = vmatpush.msra.mxu0 0.0
        %781 = vmatpush.msra.mxu0 0.0
        %782 = vmatpush.msra.mxu0 0.0
        %783 = vmatpush.msra.mxu0 0.0
        %784 = vmatpush.msra.mxu0 0.0
        %785 = vmatpush.msra.mxu0 0.0
        %786 = vmatpush.msra.mxu0 %v353
        %787 = vmatpush.msra.mxu0 %v352
        %788 = vmatmul.f32.gmra.mxu0 %v770
        %v789 = vpop.f32.mrf.mxu0
        %v790 = vadd.f32 0.0, %v789
        %791 = vdwg.mxu0
        %v793 = vsel %vm630, %v629, 0
        %795 = vmatpush.msra.mxu0 0.0
        %796 = vmatpush.msra.mxu0 0.0
        %797 = vmatpush.msra.mxu0 0.0
        %798 = vmatpush.msra.mxu0 0.0
        %799 = vmatpush.msra.mxu0 0.0
        %800 = vmatpush.msra.mxu0 0.0
        %801 = vmatpush.msra.mxu0 0.0
        %802 = vmatpush.msra.mxu0 0.0
        %803 = vmatpush.msra.mxu0 0.0
        %804 = vmatpush.msra.mxu0 0.0
        %805 = vmatpush.msra.mxu0 0.0
        %806 = vmatpush.msra.mxu0 0.0
        %807 = vmatpush.msra.mxu0 0.0
        %808 = vmatpush.msra.mxu0 0.0
        %809 = vmatpush.msra.mxu0 %v355
        %810 = vmatpush.msra.mxu0 %v354
        %811 = vmatmul.f32.gmra.mxu0 %v793
        %v812 = vpop.f32.mrf.mxu0
        %v813 = vadd.f32 0.0, %v812
        %814 = vdwg.mxu0
        %v815 = vld [vmem:[%s3] sm:$0xff]
        %v816 = vld [vmem:[%s3 + $0x8] sm:$0xff]
        %v817 = vld [vmem:[%s3 + $0x10] sm:$0xff]
        %v818 = vld [vmem:[%s3 + $0x18] sm:$0xff]
        %v819 = vld [vmem:[%s3 + $0x20] sm:$0xff]
        %v820 = vld [vmem:[%s3 + $0x28] sm:$0xff]
        %v821 = vld [vmem:[%s3 + $0x30] sm:$0xff]
        %v822 = vld [vmem:[%s3 + $0x38] sm:$0xff]
        %v823 = vld [vmem:[%s3 + $0x40] sm:$0xff]
        %v824 = vld [vmem:[%s3 + $0x48] sm:$0xff]
        %v825 = vld [vmem:[%s3 + $0x50] sm:$0xff]
        %v826 = vld [vmem:[%s3 + $0x58] sm:$0xff]
        %v827 = vld [vmem:[%s3 + $0x60] sm:$0xff]
        %v828 = vld [vmem:[%s3 + $0x68] sm:$0xff]
        %v829 = vld [vmem:[%s3 + $0x70] sm:$0xff]
        %v830 = vld [vmem:[%s3 + $0x78] sm:$0xff]
        %v831 = vld [vmem:[%s4] sm:$0x1]
        %v833 = vperm.slane %v831, 0
        %v843 = vrot.slane %v675, 7
        %vm844 = vcmask 1041409
        %v845 = vsel %vm844, %v843, %v652
        %v846 = vrot.slane %v698, 6
        %vm847 = vcmask 1042434
        %v848 = vsel %vm847, %v846, %v845
        %v849 = vrot.slane %v721, 5
        %vm850 = vcmask 1043459
        %v851 = vsel %vm850, %v849, %v848
        %v852 = vrot.slane %v744, 4
        %vm853 = vcmask 1044484
        %v854 = vsel %vm853, %v852, %v851
        %v855 = vrot.slane %v767, 3
        %vm856 = vcmask 1045509
        %v857 = vsel %vm856, %v855, %v854
        %v858 = vrot.slane %v790, 2
        %vm859 = vcmask 1046534
        %v860 = vsel %vm859, %v858, %v857
        %v861 = vrot.slane %v813, 1
        %vm862 = vcmask 1047559
        %v863 = vsel %vm862, %v861, %v860
        %865 = vmatpush.msra.mxu0 %v830
        %866 = vmatpush.msra.mxu0 %v829
        %867 = vmatpush.msra.mxu0 %v828
        %868 = vmatpush.msra.mxu0 %v827
        %869 = vmatpush.msra.mxu0 %v826
        %870 = vmatpush.msra.mxu0 %v825
        %871 = vmatpush.msra.mxu0 %v824
        %872 = vmatpush.msra.mxu0 %v823
        %873 = vmatpush.msra.mxu0 %v822
        %874 = vmatpush.msra.mxu0 %v821
        %875 = vmatpush.msra.mxu0 %v820
        %876 = vmatpush.msra.mxu0 %v819
        %877 = vmatpush.msra.mxu0 %v818
        %878 = vmatpush.msra.mxu0 %v817
        %879 = vmatpush.msra.mxu0 %v816
        %880 = vmatpush.msra.mxu0 %v815
        %881 = vmatmul.f32.gmra.mxu0 %v863
        %v882 = vpop.f32.mrf.mxu0
        %v883 = vadd.f32 %v833, %v882
        %884 = vdwg.mxu0
        %v885 = vtanh.pop %v883
        %v886 = vld [vmem:[%s5] sm:$0xff]
        %v887 = vld [vmem:[%s5 + $0x8] sm:$0xff]
        %v888 = vld [vmem:[%s5 + $0x10] sm:$0xff]
        %v889 = vld [vmem:[%s5 + $0x18] sm:$0xff]
        %v890 = vld [vmem:[%s5 + $0x20] sm:$0xff]
        %v891 = vld [vmem:[%s5 + $0x28] sm:$0xff]
        %v892 = vld [vmem:[%s5 + $0x30] sm:$0xff]
        %v893 = vld [vmem:[%s5 + $0x38] sm:$0xff]
        %v894 = vld [vmem:[%s5 + $0x40] sm:$0xff]
        %v895 = vld [vmem:[%s5 + $0x48] sm:$0xff]
        %v896 = vld [vmem:[%s5 + $0x50] sm:$0xff]
        %v897 = vld [vmem:[%s5 + $0x58] sm:$0xff]
        %v898 = vld [vmem:[%s5 + $0x60] sm:$0xff]
        %v899 = vld [vmem:[%s5 + $0x68] sm:$0xff]
        %v900 = vld [vmem:[%s5 + $0x70] sm:$0xff]
        %v901 = vld [vmem:[%s5 + $0x78] sm:$0xff]
        %v902 = vld [vmem:[%s6] sm:$0x1]
        %v904 = vperm.slane %v902, 0
        %906 = vmatpush.msra.mxu0 %v901
        %907 = vmatpush.msra.mxu0 %v900
        %908 = vmatpush.msra.mxu0 %v899
        %909 = vmatpush.msra.mxu0 %v898
        %910 = vmatpush.msra.mxu0 %v897
        %911 = vmatpush.msra.mxu0 %v896
        %912 = vmatpush.msra.mxu0 %v895
        %913 = vmatpush.msra.mxu0 %v894
        %914 = vmatpush.msra.mxu0 %v893
        %915 = vmatpush.msra.mxu0 %v892
        %916 = vmatpush.msra.mxu0 %v891
        %917 = vmatpush.msra.mxu0 %v890
        %918 = vmatpush.msra.mxu0 %v889
        %919 = vmatpush.msra.mxu0 %v888
        %920 = vmatpush.msra.mxu0 %v887
        %921 = vmatpush.msra.mxu0 %v886
        %922 = vmatmul.f32.gmra.mxu0 %v885
        %v923 = vpop.f32.mrf.mxu0
        %v924 = vadd.f32 %v904, %v923
        %925 = vdwg.mxu0
        %vm926 = vcmask 31744
        %927 = vst.msk [vmem:[%s339] sm:$0xff] %vm926, %v924
        %p928 = scmp.lt.s32.totalorder %s24, 1
        %s929 = scalar_select %p928, %s24, 1
        %s930 = smul.addr %s929, 8
        %s931 = scalar_lea.vmem %s7, %s930
        // Predicated region
        $region57: #{tpu_custom_call.1} parent=47 // pred_check
          %p932 = pneg %p199
        $region58: #{tpu_custom_call.1} parent=47 // pred_check_branch
          %934 = sbr.rel (%p932) target = $region60
        $region59: #{tpu_custom_call.1} parent=47 // pred_region
          _
        $region60: #{tpu_custom_call.1} parent=47 // pred_fallthru
          _
      $region48: #{tpu_custom_call.1} parent=5 // pred_fallthru
        _
      %p935 = scmp.le.s32.totalorder 2, %s19
      // Predicated region
      $region61: #{tpu_custom_call.1} parent=5 // pred_check
        %p936 = pneg %p935
      $region62: #{tpu_custom_call.1} parent=5 // pred_check_branch
        %938 = sbr.rel (%p936) target = $region64
      $region63: #{tpu_custom_call.1} parent=5 // pred_region
        %s939 = ssub.s32 %s19, 2
        // Predicated region
        $region65: #{tpu_custom_call.1} parent=63 // pred_check
          %p940 = pneg %p205
        $region66: #{tpu_custom_call.1} parent=63 // pred_check_branch
          %942 = sbr.rel (%p940) target = $region68
        $region67: #{tpu_custom_call.1} parent=63 // pred_region
          %p943 = scmp.lt.s32.totalorder %s25, 1
          %s944 = scalar_select %p943, %s25, 1
          %s945 = smul.addr %s944, 8
          %s946 = scalar_lea.vmem %s7, %s945
        $region68: #{tpu_custom_call.1} parent=63 // pred_fallthru
          _
      $region64: #{tpu_custom_call.1} parent=5 // pred_fallthru
        _
    $region6: #{tpu_custom_call.1} parent=1 // loop_footer
      %s23 = sadd.s32 1, %s19
    $region7: #{tpu_custom_call.1} parent=1 // loop_footer_branch
      %18 = sbr.rel target = $region3
    $region8: #{tpu_custom_call.1} parent=1 // loop_exit
      _
    %947 = vsyncpa [#allocation3], 1
    %s948 = scalar_lea.sflag [#allocation3], 1
    %949 = vsyncpa %s948, 1
    %950 = vsyncpa [#allocation5], 1
    %s951 = scalar_lea.sflag [#allocation5], 1
    %952 = vsyncpa %s951, 1

</llo_original>
